<compile_context>
chip_gen: v6e
topology: v6e:2x2x1
jax: 0.10.0
libtpu: 0.0.40
codegen_flags: <defaults>
</compile_context>

<pallas_src>
import jax
import jax.numpy as jnp
from jax.experimental import pallas as pl
from jax.experimental.pallas import tpu as pltpu


def _round_up(x, m):
    return (x + m - 1) // m * m


def _conv_matmul_kernel(p_ref, w_ref, b_ref, o_ref):
    """One grid step = one (image n, M tile i, Cout tile j).

    p_ref : (tm, Kp)  bf16  im2col patches tile (K-fused taps)
    w_ref : (Kp, tn)  bf16  pre-perturbed weight tile
    b_ref : (1, tn)   f32   pre-perturbed bias tile
    o_ref : (tm, tn)  out dtype (lane-dense, tn % 128 == 0)
    """
    acc = jnp.dot(p_ref[...], w_ref[...], preferred_element_type=jnp.float32)
    o_ref[...] = (acc + b_ref[...]).astype(o_ref.dtype)


def perturbed_conv2d(x, w_mean, w_var, w_noise, b_mean, b_var, b_noise,
                     *, stride=1, padding=0, dilation=1,
                     w_mask=None, mask_noise=False,
                     compute_dtype=jnp.bfloat16, out_dtype=None):
    """PerturbedConv2d.forward. x: NCHW, weights: OIHW. Returns NCHW."""
    N, Cin, H, W = x.shape
    Cout, Cin_w, Kh, Kw = w_mean.shape
    assert Cin == Cin_w, "groups != 1 not supported"  # TODO(synk): grouped conv
    s, d, p = int(stride), int(dilation), int(padding)
    assert s >= 1 and d >= 1
    Hout = (H + 2 * p - d * (Kh - 1) - 1) // s + 1
    Wout = (W + 2 * p - d * (Kw - 1) - 1) // s + 1
    Mimg = Hout * Wout
    out_dtype = x.dtype if out_dtype is None else out_dtype

    # ---- perturb the posterior ONCE in the wrapper (tiny fused XLA op) ----
    w_noise_eff = w_noise if (w_mask is None or not mask_noise) else w_mask * w_noise
    w_pert = w_mean + jax.nn.softplus(w_var) * w_noise_eff      # (Cout,Cin,Kh,Kw)
    b_pert = b_mean + jax.nn.softplus(b_var) * b_noise          # (Cout,)

    # ---- per-generation tiling parameters ----
    kind = jax.devices()[0].device_kind.lower()
    gen_tn = 256 if ("v6" in kind or "v7" in kind) else 128     # MXU N width
    try:
        vmem_cap = int(pltpu.get_tpu_info().vmem_capacity_bytes)
    except Exception:
        vmem_cap = 64 * 2**20                                   # conservative
    tn = min(gen_tn, _round_up(Cout, 128))
    Coutp = _round_up(Cout, tn)

    # M (output pixels) tile: multiple of 256 for real activations so MXU M
    # passes are full; tiny layers just round to the sublane multiple.
    if Mimg >= 512:
        tm = 512
    elif Mimg >= 256:
        tm = 256
    else:
        tm = _round_up(Mimg, 8)
    Mp = _round_up(Mimg, tm)

    # K-fused contraction width (taps x Cin), padded to sublane multiple.
    Kraw = Kh * Kw * Cin
    Kp = _round_up(Kraw, 8)

    # ---- weight / bias layout: (Kh*Kw*Cin, Coutp) bf16, (1, Coutp) f32 ----
    wk = jnp.transpose(w_pert, (2, 3, 1, 0)).reshape(Kraw, Cout)
    wk = jnp.pad(wk, ((0, Kp - Kraw), (0, Coutp - Cout))).astype(compute_dtype)
    bk = jnp.pad(b_pert, (0, Coutp - Cout)).reshape(1, Coutp).astype(jnp.float32)

    # ---- wrapper-side im2col (K-fusion): (N, Mp, Kp) ----
    # Tap order (kh, kw, cin) matches the weight reshape above exactly.
    xn = jnp.transpose(x, (0, 2, 3, 1))                                     # NHWC
    xn = jnp.pad(xn, ((0, 0), (p, p), (p, p), (0, 0)))
    taps = []
    for kh in range(Kh):
        for kw in range(Kw):
            h0, w0 = kh * d, kw * d
            tap = jax.lax.slice(
                xn,
                (0, h0, w0, 0),
                (N, h0 + (Hout - 1) * s + 1, w0 + (Wout - 1) * s + 1, Cin),
                (1, s, s, 1))                                   # (N,Hout,Wout,Cin)
            taps.append(tap)
    patches = jnp.concatenate(taps, axis=-1).reshape(N, Mimg, Kraw)
    patches = jnp.pad(patches, ((0, 0), (0, Mp - Mimg), (0, Kp - Kraw)))
    patches = patches.astype(compute_dtype)

    # ---- VMEM budget from the actual (double-buffered) block sizes ----
    cb = jnp.dtype(compute_dtype).itemsize
    ob = jnp.dtype(out_dtype).itemsize
    need = (2 * tm * Kp * cb          # patches block
            + 2 * Kp * tn * cb        # weight tile
            + 2 * tn * 4              # bias tile
            + 2 * tm * tn * ob)       # output block
    vmem_limit = int(min(int(0.85 * vmem_cap), max(2 * need, 32 * 2**20)))

    out = pl.pallas_call(
        _conv_matmul_kernel,
        out_shape=jax.ShapeDtypeStruct((N, Mp, Coutp), out_dtype),
        grid_spec=pltpu.PrefetchScalarGridSpec(
            num_scalar_prefetch=0,
            grid=(N, Mp // tm, Coutp // tn),
            in_specs=[
                # im2col patches: one (tm, Kp) tile per (n, i); constant in j.
                pl.BlockSpec((None, tm, Kp), lambda n, i, j: (n, i, 0)),
                # pre-perturbed weight, one lane-dense Cout tile.
                pl.BlockSpec((Kp, tn), lambda n, i, j: (0, j)),
                # pre-perturbed bias tile (f32).
                pl.BlockSpec((1, tn), lambda n, i, j: (0, j)),
            ],
            out_specs=pl.BlockSpec((None, tm, tn), lambda n, i, j: (n, i, j)),
        ),
        compiler_params=pltpu.CompilerParams(
            dimension_semantics=("parallel", "parallel", "parallel"),
            vmem_limit_bytes=vmem_limit,
        ),
    )(patches, wk, bk)

    out = out[:, :Mimg, :Cout].reshape(N, Hout, Wout, Cout)
    return jnp.transpose(out, (0, 3, 1, 2))                                 # NCHW


if __name__ == "__main__":
    # Module config (synthetic, deterministic): Conv2d(4 -> 8, kernel 3x3,
    # stride 1, padding 1, bias=True); init_var = -4.0 as in __init__.
    N, Cin, H, W = 2, 4, 16, 16
    Cout, Kh, Kw = 8, 3, 3
    stride, padding, dilation = 1, 1, 1
    init_var = -4.0

    key = jax.random.PRNGKey(0)
    k_w, k_b, k_wn, k_bn, k_x = jax.random.split(key, 5)

    # posterior_mean parameters (deterministic init)
    w_mean = jax.random.normal(k_w, (Cout, Cin, Kh, Kw), jnp.float32) * 0.1
    b_mean = jax.random.normal(k_b, (Cout,), jnp.float32) * 0.1
    # posterior_var parameters: constant-initialized to init_var
    w_var = jnp.full((Cout, Cin, Kh, Kw), init_var, jnp.float32)
    b_var = jnp.full((Cout,), init_var, jnp.float32)
    # the randn draws of perturb_posterior (deterministic here)
    w_noise = jax.random.normal(k_wn, (Cout, Cin, Kh, Kw), jnp.float32)
    b_noise = jax.random.normal(k_bn, (Cout,), jnp.float32)

    x = jax.random.normal(k_x, (N, Cin, H, W), jnp.float32)

    y = perturbed_conv2d(x, w_mean, w_var, w_noise, b_mean, b_var, b_noise,
                         stride=stride, padding=padding, dilation=dilation)
    y = jax.block_until_ready(y)

    # Reference: perturb in plain JAX, cast operands to the same MXU compute
    # dtype (bf16 inputs, f32 accumulation), then lax conv.
    w_pert = w_mean + jax.nn.softplus(w_var) * w_noise
    b_pert = b_mean + jax.nn.softplus(b_var) * b_noise
    ref = jax.lax.conv_general_dilated(
        x.astype(jnp.bfloat16), w_pert.astype(jnp.bfloat16),
        window_strides=(stride, stride),
        padding=((padding, padding), (padding, padding)),
        rhs_dilation=(dilation, dilation),
        dimension_numbers=("NCHW", "OIHW", "NCHW"),
        preferred_element_type=jnp.float32,
    ).astype(jnp.float32) + b_pert[None, :, None, None]

    assert y.shape == ref.shape == (N, Cout, H, W)
    assert jnp.allclose(y, ref, atol=2e-2, rtol=2e-2), "mismatch vs reference conv"
    print("KERNEL_OK")
</pallas_src>

<mosaic_0001>
module attributes {stable_mosaic.version = 11 : i64} {
  func.func @_conv_matmul_kernel(%arg0: i32, %arg1: i32, %arg2: i32, %arg3: memref<1x256x40xbf16, #tpu.memory_space<vmem>>, %arg4: memref<40x128xbf16, #tpu.memory_space<vmem>>, %arg5: memref<1x128xf32, #tpu.memory_space<vmem>>, %arg6: memref<1x256x128xf32, #tpu.memory_space<vmem>>) attributes {dimension_semantics = [#tpu.dimension_semantics<parallel>, #tpu.dimension_semantics<parallel>, #tpu.dimension_semantics<parallel>], iteration_bounds = array<i64: 2, 1, 1>, scalar_prefetch = 0 : i64, scratch_operands = 0 : i64, tpu.core_type = #tpu.core_type<tc>, window_params = [{transform_indices = @transform_0, window_bounds = array<i64: 1, 256, 40>}, {transform_indices = @transform_1, window_bounds = array<i64: 40, 128>}, {transform_indices = @transform_2, window_bounds = array<i64: 1, 128>}, {transform_indices = @transform_3, window_bounds = array<i64: 1, 256, 128>}]} {
    %c0 = arith.constant 0 : index
    %c0_0 = arith.constant 0 : index
    %c0_1 = arith.constant 0 : index
    %0 = vector.load %arg3[%c0, %c0_0, %c0_1] : memref<1x256x40xbf16, #tpu.memory_space<vmem>>, vector<1x256x40xbf16>
    %1 = vector.shape_cast %0 : vector<1x256x40xbf16> to vector<256x40xbf16>
    %c0_2 = arith.constant 0 : index
    %c0_3 = arith.constant 0 : index
    %2 = vector.load %arg4[%c0_2, %c0_3] : memref<40x128xbf16, #tpu.memory_space<vmem>>, vector<40x128xbf16>
    %cst = arith.constant dense<0.000000e+00> : vector<256x128xf32>
    %3 = tpu.matmul %1, %2, %cst {dimension_numbers = #tpu.dot_dimension_numbers<[1], [0], [0], [1], [0, 0, 1, 1], [], []>} : vector<256x40xbf16>, vector<40x128xbf16>, vector<256x128xf32> -> vector<256x128xf32>
    %c0_4 = arith.constant 0 : index
    %c0_5 = arith.constant 0 : index
    %4 = vector.load %arg5[%c0_4, %c0_5] : memref<1x128xf32, #tpu.memory_space<vmem>>, vector<1x128xf32>
    %5 = vector.broadcast %4 : vector<1x128xf32> to vector<256x128xf32>
    %6 = arith.addf %3, %5 : vector<256x128xf32>
    %c0_6 = arith.constant 0 : index
    %c0_7 = arith.constant 0 : index
    %c0_8 = arith.constant 0 : index
    %7 = vector.load %arg6[%c0_6, %c0_7, %c0_8] : memref<1x256x128xf32, #tpu.memory_space<vmem>>, vector<1x256x128xf32>
    %8 = vector.shape_cast %7 : vector<1x256x128xf32> to vector<256x128xf32>
    %9 = vector.shape_cast %6 : vector<256x128xf32> to vector<1x256x128xf32>
    tpu.vector_store %arg6[%c0_6, %c0_7, %c0_8], %9 {strides = array<i32>} : memref<1x256x128xf32, #tpu.memory_space<vmem>>, vector<1x256x128xf32>,
    return
  }
  func.func @transform_0(%arg0: i32, %arg1: i32, %arg2: i32) -> (i32, i32, i32) {
    %c0_i32 = arith.constant 0 : i32
    %c0_i32_0 = arith.constant 0 : i32
    return %arg0, %arg1, %c0_i32 : i32, i32, i32
  }
  func.func @transform_1(%arg0: i32, %arg1: i32, %arg2: i32) -> (i32, i32) {
    %c0_i32 = arith.constant 0 : i32
    %c0_i32_0 = arith.constant 0 : i32
    return %c0_i32, %arg2 : i32, i32
  }
  func.func @transform_2(%arg0: i32, %arg1: i32, %arg2: i32) -> (i32, i32) {
    %c0_i32 = arith.constant 0 : i32
    %c0_i32_0 = arith.constant 0 : i32
    return %c0_i32, %arg2 : i32, i32
  }
  func.func @transform_3(%arg0: i32, %arg1: i32, %arg2: i32) -> (i32, i32, i32) {
    %c0_i32 = arith.constant 0 : i32
    return %arg0, %arg1, %arg2 : i32, i32, i32
  }
}

</mosaic_0001>

<llo_original>
// kernel: tpu_custom_call.1
$region0: #{tpu_custom_call.1}
  #allocation0 [shape = 'u32[]', space=smem, size = 0x4, offset = 0x4, fixed_abs, tag = 'smem constant byte address 0x4 - core index']
  #allocation1 [shape = 'u32[144,128]{1,0:T(1,128)}', space=vmem, size = 0x12000, scoped, tag = 'internal scratch']
  %s0 = inlined_call_operand.vmem [shape: bf16[2,256,40], index: 0, kind: input, shape index: {}]
  %s1 = inlined_call_operand.vmem [shape: bf16[40,128], index: 1, kind: input, shape index: {}]
  %s2 = inlined_call_operand.vmem [shape: f32[1,128], index: 2, kind: input, shape index: {}]
  %s3 = inlined_call_operand.hbm [shape: f32[2,256,128], index: 3, kind: output, shape index: {}]
  %s4 = sld [smem:[#allocation0]]
  $region45: #{tpu_custom_call.1} parent=0
    _
  %s6 = ssub.s32 1, %s4
  %s7 = scalar_select 0, %s6, %s4
  $region1: #{tpu_custom_call.1} parent=0
    #allocation2 [shape = 'u8[262144]{0}', space=vmem, size = 0x40000, scoped, tag = 'output window, operand 0']
    #allocation3 [shape = 's32[2]{0}', space=sflag, size = 0x8, scoped, tag = 'scoped memory for tpu_custom_call.1']
    %8 = vsyncpa [#allocation3], 0
    %s9 = scalar_lea.sflag [#allocation3], 1
    %10 = vsyncpa %s9, 0
    loop: start=0, step=1, limit=4
    $region2: #{tpu_custom_call.1} parent=1 // loop_pre_header
      _
    $region3: #{tpu_custom_call.1} parent=1 // loop_header
      %s12 = sphi 0, %s16
      %p13 = scmp.ge.s32.totalorder %s12, 4
      %s19 = sphi 0, %s38
      %s20 = sphi 0, %s34
      %s21 = sphi 0, %s30
      %s22 = sphi 0, %s19
      %s23 = sphi 0, %s20
      %s24 = sphi 0, %s21
      %s25 = sphi 0, %s22
      %s26 = sphi 0, %s23
      %s27 = sphi 0, %s24
      %s43 = sphi 0, %s45
      %s46 = sphi 0, %s43
      %s47 = sphi 0, %s46
      %s63 = sphi 0, %s47
      %s69 = sphi 0, %s71
      %s72 = sphi 0, %s69
      %s73 = sphi 0, %s72
      %s89 = sphi 0, %s73
      %s95 = sphi 0, %s97
      %s98 = sphi 0, %s95
      %s99 = sphi 0, %s98
      %s115 = sphi 0, %s99
      %s125 = sphi 0, %s127
      %s128 = sphi 0, %s125
      %s129 = sphi 0, %s128
      %s145 = sphi 0, %s129
    $region4: #{tpu_custom_call.1} parent=1 // loop_header_branch
      %15 = sbr.rel (%p13) target = $region8
    $region5: #{tpu_custom_call.1} parent=1 // loop_body
      %s17 = ssub.s32 %s12, 1
      %s18 = ssub.s32 %s12, 2
      %s28 = sadd.s32 1, %s21
      %p29 = scmp.ge.s32.totalorder %s28, 1
      %s30 = scalar_select %p29, 0, %s28
      %s31 = sadd.s32 1, %s20
      %s32 = scalar_select %p29, %s31, %s20
      %p33 = scmp.ge.s32.totalorder %s32, 1
      %s34 = scalar_select %p33, 0, %s32
      %s35 = sadd.s32 1, %s19
      %s36 = scalar_select %p33, %s35, %s19
      %p37 = scmp.ge.s32.totalorder %s36, 2
      %s38 = scalar_select %p37, 0, %s36
      %s39 = ssub.s32 %s19, %s38
      %s40 = ssub.s32 %s20, %s34
      %s41 = sor.u32 %s39, %s40
      %p42 = scmp.eq.s32.totalorder %s41, 0
      %s44 = sadd.s32 %s43, 1
      %s45 = scalar_select %p42, %s43, %s44
      %p48 = pneg %p42
      %p49 = scmp.eq.s32.totalorder %s12, 1
      %p50 = por %p48, %p49
      %p51 = scmp.ne.s32.totalorder %s43, %s46
      %p52 = scmp.eq.s32.totalorder %s12, 0
      %p53 = por %p51, %p52
      %p54 = scmp.ne.s32.totalorder %s43, %s46
      %p55 = scmp.eq.s32.totalorder %s17, 1
      %p56 = por %p54, %p55
      %p57 = scmp.ne.s32.totalorder %s46, %s47
      %p58 = scmp.eq.s32.totalorder %s17, 0
      %p59 = por %p57, %p58
      %p60 = scmp.ne.s32.totalorder %s46, %s47
      %p61 = scmp.eq.s32.totalorder %s18, 1
      %p62 = por %p60, %p61
      %p64 = scmp.ne.s32.totalorder %s47, %s63
      %p65 = scmp.eq.s32.totalorder %s18, 0
      %p66 = por %p64, %p65
      %s67 = ssub.s32 %s21, %s30
      %p68 = scmp.eq.s32.totalorder %s67, 0
      %s70 = sadd.s32 %s69, 1
      %s71 = scalar_select %p68, %s69, %s70
      %p74 = pneg %p68
      %p75 = scmp.eq.s32.totalorder %s12, 1
      %p76 = por %p74, %p75
      %p77 = scmp.ne.s32.totalorder %s69, %s72
      %p78 = scmp.eq.s32.totalorder %s12, 0
      %p79 = por %p77, %p78
      %p80 = scmp.ne.s32.totalorder %s69, %s72
      %p81 = scmp.eq.s32.totalorder %s17, 1
      %p82 = por %p80, %p81
      %p83 = scmp.ne.s32.totalorder %s72, %s73
      %p84 = scmp.eq.s32.totalorder %s17, 0
      %p85 = por %p83, %p84
      %p86 = scmp.ne.s32.totalorder %s72, %s73
      %p87 = scmp.eq.s32.totalorder %s18, 1
      %p88 = por %p86, %p87
      %p90 = scmp.ne.s32.totalorder %s73, %s89
      %p91 = scmp.eq.s32.totalorder %s18, 0
      %p92 = por %p90, %p91
      %s93 = ssub.s32 %s21, %s30
      %p94 = scmp.eq.s32.totalorder %s93, 0
      %s96 = sadd.s32 %s95, 1
      %s97 = scalar_select %p94, %s95, %s96
      %p100 = pneg %p94
      %p101 = scmp.eq.s32.totalorder %s12, 1
      %p102 = por %p100, %p101
      %p103 = scmp.ne.s32.totalorder %s95, %s98
      %p104 = scmp.eq.s32.totalorder %s12, 0
      %p105 = por %p103, %p104
      %p106 = scmp.ne.s32.totalorder %s95, %s98
      %p107 = scmp.eq.s32.totalorder %s17, 1
      %p108 = por %p106, %p107
      %p109 = scmp.ne.s32.totalorder %s98, %s99
      %p110 = scmp.eq.s32.totalorder %s17, 0
      %p111 = por %p109, %p110
      %p112 = scmp.ne.s32.totalorder %s98, %s99
      %p113 = scmp.eq.s32.totalorder %s18, 1
      %p114 = por %p112, %p113
      %p116 = scmp.ne.s32.totalorder %s99, %s115
      %p117 = scmp.eq.s32.totalorder %s18, 0
      %p118 = por %p116, %p117
      %s119 = ssub.s32 %s19, %s38
      %s120 = ssub.s32 %s20, %s34
      %s121 = sor.u32 %s119, %s120
      %s122 = ssub.s32 %s21, %s30
      %s123 = sor.u32 %s121, %s122
      %p124 = scmp.eq.s32.totalorder %s123, 0
      %s126 = sadd.s32 %s125, 1
      %s127 = scalar_select %p124, %s125, %s126
      %p130 = pneg %p124
      %p131 = scmp.eq.s32.totalorder %s12, 1
      %p132 = por %p130, %p131
      %p133 = scmp.ne.s32.totalorder %s125, %s128
      %p134 = scmp.eq.s32.totalorder %s12, 0
      %p135 = por %p133, %p134
      %p136 = scmp.ne.s32.totalorder %s125, %s128
      %p137 = scmp.eq.s32.totalorder %s17, 1
      %p138 = por %p136, %p137
      %p139 = scmp.ne.s32.totalorder %s128, %s129
      %p140 = scmp.eq.s32.totalorder %s17, 0
      %p141 = por %p139, %p140
      %p142 = scmp.ne.s32.totalorder %s128, %s129
      %p143 = scmp.eq.s32.totalorder %s18, 1
      %p144 = por %p142, %p143
      %p146 = scmp.ne.s32.totalorder %s129, %s145
      %p147 = scmp.eq.s32.totalorder %s18, 0
      %p148 = por %p146, %p147
      %p149 = scmp.le.s32.totalorder 1, %s12
      %p150 = scmp.lt.s32.totalorder %s12, 3
      %p151 = pnand %p149, %p150
      %p152 = pneg %p151
      // Predicated region
      $region9: #{tpu_custom_call.1} parent=5 // pred_check
        _
      $region10: #{tpu_custom_call.1} parent=5 // pred_check_branch
        %154 = sbr.rel (%p151) target = $region12
      $region11: #{tpu_custom_call.1} parent=5 // pred_region
        %s155 = ssub.s32 %s12, 1
        // Predicated region
        $region13: #{tpu_custom_call.1} parent=11 // pred_check
          %p156 = pneg %p85
        $region14: #{tpu_custom_call.1} parent=11 // pred_check_branch
          %158 = sbr.rel (%p156) target = $region16
        $region15: #{tpu_custom_call.1} parent=11 // pred_region
          %p159 = scmp.lt.s32.totalorder %s24, 0
          %s160 = scalar_select %p159, %s24, 0
          %s161 = smul.addr %s160, 4
          %s162 = scalar_lea.vmem %s1, %s161
        $region16: #{tpu_custom_call.1} parent=11 // pred_fallthru
          _
        // Predicated region
        $region17: #{tpu_custom_call.1} parent=11 // pred_check
          %p163 = pneg %p111
        $region18: #{tpu_custom_call.1} parent=11 // pred_check_branch
          %165 = sbr.rel (%p163) target = $region20
        $region19: #{tpu_custom_call.1} parent=11 // pred_region
          %p166 = scmp.lt.s32.totalorder %s24, 0
          %s167 = scalar_select %p166, %s24, 0
          %s168 = scalar_lea.vmem %s2, %s167
        $region20: #{tpu_custom_call.1} parent=11 // pred_fallthru
          _
      $region12: #{tpu_custom_call.1} parent=5 // pred_fallthru
        _
      %p169 = scmp.lt.s32.totalorder %s12, 2
      // Predicated region
      $region21: #{tpu_custom_call.1} parent=5 // pred_check
        %p170 = pneg %p169
      $region22: #{tpu_custom_call.1} parent=5 // pred_check_branch
        %172 = sbr.rel (%p170) target = $region24
      $region23: #{tpu_custom_call.1} parent=5 // pred_region
        // Predicated region
        $region25: #{tpu_custom_call.1} parent=23 // pred_check
          %p173 = pneg %p53
        $region26: #{tpu_custom_call.1} parent=23 // pred_check_branch
          %175 = sbr.rel (%p173) target = $region28
        $region27: #{tpu_custom_call.1} parent=23 // pred_region
          %s176 = smul.u32 32, %s20
          %p177 = scmp.lt.s32.totalorder %s19, 1
          %s178 = scalar_select %p177, %s19, 1
          %p179 = scmp.lt.s32.totalorder %s176, 31
          %s180 = scalar_select %p179, %s176, 31
          %s181 = smul.addr %s178, 32
          %s182 = sadd.s32 %s180, %s181
          %s183 = smul.addr %s182, 4
          %s184 = scalar_lea.vmem %s0, %s183
          %s185 = smul.u32 32, %s20
        $region28: #{tpu_custom_call.1} parent=23 // pred_fallthru
          _
      $region24: #{tpu_custom_call.1} parent=5 // pred_fallthru
        _
      %p186 = scmp.le.s32.totalorder 1, %s12
      %p187 = scmp.lt.s32.totalorder %s12, 3
      %p188 = pnand %p186, %p187
      %p189 = pneg %p188
      // Predicated region
      $region29: #{tpu_custom_call.1} parent=5 // pred_check
        _
      $region30: #{tpu_custom_call.1} parent=5 // pred_check_branch
        %191 = sbr.rel (%p188) target = $region32
      $region31: #{tpu_custom_call.1} parent=5 // pred_region
        %s192 = ssub.s32 %s12, 1
        %s193 = smul.u32 32, %s23
        %p194 = scmp.lt.s32.totalorder %s22, 1
        %s195 = scalar_select %p194, %s22, 1
        %p196 = scmp.lt.s32.totalorder %s193, 31
        %s197 = scalar_select %p196, %s193, 31
        %s198 = smul.addr %s195, 32
        %s199 = sadd.s32 %s197, %s198
        %s200 = smul.addr %s199, 4
        %s201 = scalar_lea.vmem %s0, %s200
        %p202 = pneg %p59
        %p203 = pneg %p56
        %p204 = scmp.lt.s32.totalorder %s24, 0
        %s205 = scalar_select %p204, %s24, 0
        %s206 = smul.addr %s205, 4
        %s207 = scalar_lea.vmem %s1, %s206
        %p208 = pneg %p85
        %p209 = pneg %p82
        %p210 = scmp.lt.s32.totalorder %s24, 0
        %s211 = scalar_select %p210, %s24, 0
        %s212 = scalar_lea.vmem %s2, %s211
        %p213 = pneg %p111
        %p214 = pneg %p108
        %p215 = pneg %p141
        %p216 = pneg %p138
        %s217 = sand.u32 %s128, 1
        %s218 = scalar_lea.sflag [#allocation3], %s217
        %s219 = sand.u32 %s128, 1
        %s220 = smul.addr %s219, 256
        %s221 = scalar_lea.vmem [#allocation2], %s220
        %s222 = smul.u32 32, %s23
        %p223 = scmp.lt.s32.totalorder %s22, 1
        %s224 = scalar_select %p223, %s22, 1
        %p225 = scmp.lt.s32.totalorder %s222, 31
        %s226 = scalar_select %p225, %s222, 31
        %s227 = smul.addr %s224, 32
        %s228 = sadd.s32 %s226, %s227
        %s229 = smul.addr %s228, 4
        %s230 = scalar_lea.vmem %s0, %s229
        %s231 = smul.u32 32, %s23
        %p232 = scmp.lt.s32.totalorder %s24, 0
        %s233 = scalar_select %p232, %s24, 0
        %s234 = smul.addr %s233, 4
        %s235 = scalar_lea.vmem %s1, %s234
        %p236 = scmp.lt.s32.totalorder %s24, 0
        %s237 = scalar_select %p236, %s24, 0
        %s238 = scalar_lea.vmem %s2, %s237
        %s239 = smul.u32 32, %s23
        %v241 = vld [vmem:[%s230] sm:$0xf]
        %v242 = vld [vmem:[%s230 + $0x4] sm:$0xf]
        %v243 = vld [vmem:[%s230 + $0x8] sm:$0xf]
        %v244 = vld [vmem:[%s230 + $0xc] sm:$0xf]
        %v245 = vld [vmem:[%s230 + $0x10] sm:$0xf]
        %v246 = vld [vmem:[%s230 + $0x14] sm:$0xf]
        %v247 = vld [vmem:[%s230 + $0x18] sm:$0xf]
        %v248 = vld [vmem:[%s230 + $0x1c] sm:$0xf]
        %v249 = vld [vmem:[%s230 + $0x20] sm:$0xf]
        %v250 = vld [vmem:[%s230 + $0x24] sm:$0xf]
        %v251 = vld [vmem:[%s230 + $0x28] sm:$0xf]
        %v252 = vld [vmem:[%s230 + $0x2c] sm:$0xf]
        %v253 = vld [vmem:[%s230 + $0x30] sm:$0xf]
        %v254 = vld [vmem:[%s230 + $0x34] sm:$0xf]
        %v255 = vld [vmem:[%s230 + $0x38] sm:$0xf]
        %v256 = vld [vmem:[%s230 + $0x3c] sm:$0xf]
        %v257 = vld [vmem:[%s230 + $0x40] sm:$0xf]
        %v258 = vld [vmem:[%s230 + $0x44] sm:$0xf]
        %v259 = vld [vmem:[%s230 + $0x48] sm:$0xf]
        %v260 = vld [vmem:[%s230 + $0x4c] sm:$0xf]
        %v261 = vld [vmem:[%s230 + $0x50] sm:$0xf]
        %v262 = vld [vmem:[%s230 + $0x54] sm:$0xf]
        %v263 = vld [vmem:[%s230 + $0x58] sm:$0xf]
        %v264 = vld [vmem:[%s230 + $0x5c] sm:$0xf]
        %v265 = vld [vmem:[%s230 + $0x60] sm:$0xf]
        %v266 = vld [vmem:[%s230 + $0x64] sm:$0xf]
        %v267 = vld [vmem:[%s230 + $0x68] sm:$0xf]
        %v268 = vld [vmem:[%s230 + $0x6c] sm:$0xf]
        %v269 = vld [vmem:[%s230 + $0x70] sm:$0xf]
        %v270 = vld [vmem:[%s230 + $0x74] sm:$0xf]
        %v271 = vld [vmem:[%s230 + $0x78] sm:$0xf]
        %v272 = vld [vmem:[%s230 + $0x7c] sm:$0xf]
        %v273 = vld [vmem:[%s235] sm:$0xf]
        %v274 = vld [vmem:[%s235 + $0x4] sm:$0xf]
        %v275 = vld [vmem:[%s235 + $0x8] sm:$0xf]
        %v276 = vld [vmem:[%s235 + $0xc] sm:$0xf]
        %v277 = vld [vmem:[%s235 + $0x10] sm:$0xf]
        %v278 = vld [vmem:[%s238] sm:$0x1]
        %v280 = vlaneseq
        %v281 = vshrl.u32 %v280, 7
        %v282 = vsub.s32 0, %v281
        %v283 = vrot.slane %v278, %v282
        %v317 = vunpack.c.l.b16 %v241
        %v318 = vunpack.c.l.b16 %v242
        %v319 = vunpack.c.l.b16 %v243
        %v320 = vunpack.c.l.b16 %v244
        %v321 = vunpack.c.l.b16 %v245
        %v322 = vunpack.c.l.b16 %v246
        %v323 = vunpack.c.l.b16 %v247
        %v324 = vunpack.c.l.b16 %v248
        %v325 = vunpack.c.l.b16 %v249
        %v326 = vunpack.c.l.b16 %v250
        %v327 = vunpack.c.l.b16 %v251
        %v328 = vunpack.c.l.b16 %v252
        %v329 = vunpack.c.l.b16 %v253
        %v330 = vunpack.c.l.b16 %v254
        %v331 = vunpack.c.l.b16 %v255
        %v332 = vunpack.c.l.b16 %v256
        %v333 = vunpack.c.l.b16 %v257
        %v334 = vunpack.c.l.b16 %v258
        %v335 = vunpack.c.l.b16 %v259
        %v336 = vunpack.c.l.b16 %v260
        %v337 = vunpack.c.l.b16 %v261
        %v338 = vunpack.c.l.b16 %v262
        %v339 = vunpack.c.l.b16 %v263
        %v340 = vunpack.c.l.b16 %v264
        %v341 = vunpack.c.l.b16 %v265
        %v342 = vunpack.c.l.b16 %v266
        %v343 = vunpack.c.l.b16 %v267
        %v344 = vunpack.c.l.b16 %v268
        %v345 = vunpack.c.l.b16 %v269
        %v346 = vunpack.c.l.b16 %v270
        %v347 = vunpack.c.l.b16 %v271
        %v348 = vunpack.c.l.b16 %v272
        %v349 = vpack.c.b16 %v318, %v317
        %v350 = vpack.c.b16 %v320, %v319
        %v351 = vpack.c.b16 %v322, %v321
        %v352 = vpack.c.b16 %v324, %v323
        %v353 = vpack.c.b16 %v326, %v325
        %v354 = vpack.c.b16 %v328, %v327
        %v355 = vpack.c.b16 %v330, %v329
        %v356 = vpack.c.b16 %v332, %v331
        %v357 = vpack.c.b16 %v334, %v333
        %v358 = vpack.c.b16 %v336, %v335
        %v359 = vpack.c.b16 %v338, %v337
        %v360 = vpack.c.b16 %v340, %v339
        %v361 = vpack.c.b16 %v342, %v341
        %v362 = vpack.c.b16 %v344, %v343
        %v363 = vpack.c.b16 %v346, %v345
        %v364 = vpack.c.b16 %v348, %v347
        %v370 = vunpack.c.l.b16 %v273
        %v371 = vunpack.c.l.b16 %v274
        %v372 = vunpack.c.l.b16 %v275
        %v373 = vunpack.c.l.b16 %v276
        %v374 = vunpack.c.l.b16 %v277
        %v375 = vpack.c.b16 %v371, %v370
        %v376 = vpack.c.b16 %v373, %v372
        %v377 = vpack.c.b16 %v374, %v374
        %vm380 = vcmask 326656
        %v382 = vsel %vm380, %v349, 0
        %v385 = vsel %vm380, %v350, 0
        %v388 = vsel %vm380, %v351, 0
        %v391 = vsel %vm380, %v352, 0
        %v394 = vsel %vm380, %v353, 0
        %v397 = vsel %vm380, %v354, 0
        %v400 = vsel %vm380, %v355, 0
        %v403 = vsel %vm380, %v356, 0
        %v406 = vsel %vm380, %v357, 0
        %v409 = vsel %vm380, %v358, 0
        %v412 = vsel %vm380, %v359, 0
        %v415 = vsel %vm380, %v360, 0
        %v418 = vsel %vm380, %v361, 0
        %v421 = vsel %vm380, %v362, 0
        %v424 = vsel %vm380, %v363, 0
        %v427 = vsel %vm380, %v364, 0
        %vm429 = vcmask 1043456
        %v431 = vsel %vm429, %v377, 0
        %433 = vmatprep.subr.bf16.mxu0 0
        %434 = vmatpush1.bf16.msra.mxu0 0
        %435 = vmatprep.subr.bf16.mxu0 0
        %436 = vmatpush1.bf16.msra.mxu0 0
        %437 = vmatprep.subr.bf16.mxu0 0
        %438 = vmatpush1.bf16.msra.mxu0 0
        %439 = vmatprep.subr.bf16.mxu0 0
        %440 = vmatpush1.bf16.msra.mxu0 0
        %441 = vmatprep.subr.bf16.mxu0 0
        %442 = vmatpush1.bf16.msra.mxu0 0
        %443 = vmatprep.subr.bf16.mxu0 0
        %444 = vmatpush1.bf16.msra.mxu0 %v431
        %445 = vmatprep.subr.bf16.mxu0 0
        %446 = vmatpush1.bf16.msra.mxu0 %v376
        %447 = vmatprep.subr.bf16.mxu0 0
        %448 = vmatpush1.bf16.msra.mxu0 %v375
        %449 = vmatprep.subr.bf16.mxu0 0
        %450 = vmatpush2.bf16.msra.mxu0 0
        %451 = vmatprep.subr.bf16.mxu0 0
        %452 = vmatpush2.bf16.msra.mxu0 0
        %453 = vmatprep.subr.bf16.mxu0 0
        %454 = vmatpush2.bf16.msra.mxu0 0
        %455 = vmatprep.subr.bf16.mxu0 0
        %456 = vmatpush2.bf16.msra.mxu0 0
        %457 = vmatprep.subr.bf16.mxu0 0
        %458 = vmatpush2.bf16.msra.mxu0 0
        %459 = vmatprep.subr.bf16.mxu0 0
        %460 = vmatpush2.bf16.msra.mxu0 0
        %461 = vmatprep.subr.bf16.mxu0 0
        %462 = vmatpush2.bf16.msra.mxu0 0
        %463 = vmatprep.subr.bf16.mxu0 0
        %464 = vmatpush2.bf16.msra.mxu0 0
        %465 = vmatprep.mubr.bf16.mxu0 0
        %466 = vmatmul.mubr.bf16.gmra.mxu0 %v382
        %v467 = vpop.f32.mrf.mxu0
        %v468 = vadd.f32 %v283, %v467
        %v469 = vpop.f32.mrf.mxu0
        %v470 = vpop.f32.mrf.mxu0
        %v471 = vadd.f32 %v283, %v470
        %v472 = vpop.f32.mrf.mxu0
        %473 = vmatprep.mubr.bf16.mxu0 0
        %474 = vmatmul.mubr.bf16.gmra.mxu0 %v385
        %v475 = vpop.f32.mrf.mxu0
        %v476 = vadd.f32 %v283, %v475
        %v477 = vpop.f32.mrf.mxu0
        %v478 = vpop.f32.mrf.mxu0
        %v479 = vadd.f32 %v283, %v478
        %v480 = vpop.f32.mrf.mxu0
        %481 = vmatprep.mubr.bf16.mxu0 0
        %482 = vmatmul.mubr.bf16.gmra.mxu0 %v388
        %v483 = vpop.f32.mrf.mxu0
        %v484 = vadd.f32 %v283, %v483
        %v485 = vpop.f32.mrf.mxu0
        %v486 = vpop.f32.mrf.mxu0
        %v487 = vadd.f32 %v283, %v486
        %v488 = vpop.f32.mrf.mxu0
        %489 = vmatprep.mubr.bf16.mxu0 0
        %490 = vmatmul.mubr.bf16.gmra.mxu0 %v391
        %v491 = vpop.f32.mrf.mxu0
        %v492 = vadd.f32 %v283, %v491
        %v493 = vpop.f32.mrf.mxu0
        %v494 = vpop.f32.mrf.mxu0
        %v495 = vadd.f32 %v283, %v494
        %v496 = vpop.f32.mrf.mxu0
        %497 = vmatprep.mubr.bf16.mxu0 0
        %498 = vmatmul.mubr.bf16.gmra.mxu0 %v394
        %v499 = vpop.f32.mrf.mxu0
        %v500 = vadd.f32 %v283, %v499
        %v501 = vpop.f32.mrf.mxu0
        %v502 = vpop.f32.mrf.mxu0
        %v503 = vadd.f32 %v283, %v502
        %v504 = vpop.f32.mrf.mxu0
        %505 = vmatprep.mubr.bf16.mxu0 0
        %506 = vmatmul.mubr.bf16.gmra.mxu0 %v397
        %v507 = vpop.f32.mrf.mxu0
        %v508 = vadd.f32 %v283, %v507
        %v509 = vpop.f32.mrf.mxu0
        %v510 = vpop.f32.mrf.mxu0
        %v511 = vadd.f32 %v283, %v510
        %v512 = vpop.f32.mrf.mxu0
        %513 = vmatprep.mubr.bf16.mxu0 0
        %514 = vmatmul.mubr.bf16.gmra.mxu0 %v400
        %v515 = vpop.f32.mrf.mxu0
        %v516 = vadd.f32 %v283, %v515
        %v517 = vpop.f32.mrf.mxu0
        %v518 = vpop.f32.mrf.mxu0
        %v519 = vadd.f32 %v283, %v518
        %v520 = vpop.f32.mrf.mxu0
        %521 = vmatprep.mubr.bf16.mxu0 0
        %522 = vmatmul.mubr.bf16.gmra.mxu0 %v403
        %v523 = vpop.f32.mrf.mxu0
        %v524 = vadd.f32 %v283, %v523
        %v525 = vpop.f32.mrf.mxu0
        %v526 = vpop.f32.mrf.mxu0
        %v527 = vadd.f32 %v283, %v526
        %v528 = vpop.f32.mrf.mxu0
        %529 = vmatprep.mubr.bf16.mxu0 0
        %530 = vmatmul.mubr.bf16.gmra.mxu0 %v406
        %v531 = vpop.f32.mrf.mxu0
        %v532 = vadd.f32 %v283, %v531
        %v533 = vpop.f32.mrf.mxu0
        %v534 = vpop.f32.mrf.mxu0
        %v535 = vadd.f32 %v283, %v534
        %v536 = vpop.f32.mrf.mxu0
        %537 = vmatprep.mubr.bf16.mxu0 0
        %538 = vmatmul.mubr.bf16.gmra.mxu0 %v409
        %v539 = vpop.f32.mrf.mxu0
        %v540 = vadd.f32 %v283, %v539
        %v541 = vpop.f32.mrf.mxu0
        %v542 = vpop.f32.mrf.mxu0
        %v543 = vadd.f32 %v283, %v542
        %v544 = vpop.f32.mrf.mxu0
        %545 = vmatprep.mubr.bf16.mxu0 0
        %546 = vmatmul.mubr.bf16.gmra.mxu0 %v412
        %v547 = vpop.f32.mrf.mxu0
        %v548 = vadd.f32 %v283, %v547
        %v549 = vpop.f32.mrf.mxu0
        %v550 = vpop.f32.mrf.mxu0
        %v551 = vadd.f32 %v283, %v550
        %v552 = vpop.f32.mrf.mxu0
        %553 = vmatprep.mubr.bf16.mxu0 0
        %554 = vmatmul.mubr.bf16.gmra.mxu0 %v415
        %v555 = vpop.f32.mrf.mxu0
        %v556 = vadd.f32 %v283, %v555
        %v557 = vpop.f32.mrf.mxu0
        %v558 = vpop.f32.mrf.mxu0
        %v559 = vadd.f32 %v283, %v558
        %v560 = vpop.f32.mrf.mxu0
        %561 = vmatprep.mubr.bf16.mxu0 0
        %562 = vmatmul.mubr.bf16.gmra.mxu0 %v418
        %v563 = vpop.f32.mrf.mxu0
        %v564 = vadd.f32 %v283, %v563
        %v565 = vpop.f32.mrf.mxu0
        %v566 = vpop.f32.mrf.mxu0
        %v567 = vadd.f32 %v283, %v566
        %v568 = vpop.f32.mrf.mxu0
        %569 = vmatprep.mubr.bf16.mxu0 0
        %570 = vmatmul.mubr.bf16.gmra.mxu0 %v421
        %v571 = vpop.f32.mrf.mxu0
        %v572 = vadd.f32 %v283, %v571
        %v573 = vpop.f32.mrf.mxu0
        %v574 = vpop.f32.mrf.mxu0
        %v575 = vadd.f32 %v283, %v574
        %v576 = vpop.f32.mrf.mxu0
        %577 = vmatprep.mubr.bf16.mxu0 0
        %578 = vmatmul.mubr.bf16.gmra.mxu0 %v424
        %v579 = vpop.f32.mrf.mxu0
        %v580 = vadd.f32 %v283, %v579
        %v581 = vpop.f32.mrf.mxu0
        %v582 = vpop.f32.mrf.mxu0
        %v583 = vadd.f32 %v283, %v582
        %v584 = vpop.f32.mrf.mxu0
        %585 = vmatprep.mubr.bf16.mxu0 0
        %586 = vmatmul.mubr.bf16.gmra.mxu0 %v427
        %v587 = vpop.f32.mrf.mxu0
        %v588 = vadd.f32 %v283, %v587
        %v589 = vpop.f32.mrf.mxu0
        %v590 = vpop.f32.mrf.mxu0
        %v591 = vadd.f32 %v283, %v590
        %v592 = vpop.f32.mrf.mxu0
        %593 = vdwg.mxu0
        %594 = vst [vmem:[%s221] sm:$0xff] %v468
        %595 = vst [vmem:[%s221 + $0x8] sm:$0xff] %v471
        %596 = vst [vmem:[%s221 + $0x10] sm:$0xff] %v476
        %597 = vst [vmem:[%s221 + $0x18] sm:$0xff] %v479
        %598 = vst [vmem:[%s221 + $0x20] sm:$0xff] %v484
        %599 = vst [vmem:[%s221 + $0x28] sm:$0xff] %v487
        %600 = vst [vmem:[%s221 + $0x30] sm:$0xff] %v492
        %601 = vst [vmem:[%s221 + $0x38] sm:$0xff] %v495
        %602 = vst [vmem:[%s221 + $0x40] sm:$0xff] %v500
        %603 = vst [vmem:[%s221 + $0x48] sm:$0xff] %v503
        %604 = vst [vmem:[%s221 + $0x50] sm:$0xff] %v508
        %605 = vst [vmem:[%s221 + $0x58] sm:$0xff] %v511
        %606 = vst [vmem:[%s221 + $0x60] sm:$0xff] %v516
        %607 = vst [vmem:[%s221 + $0x68] sm:$0xff] %v519
        %608 = vst [vmem:[%s221 + $0x70] sm:$0xff] %v524
        %609 = vst [vmem:[%s221 + $0x78] sm:$0xff] %v527
        %610 = vst [vmem:[%s221 + $0x80] sm:$0xff] %v532
        %611 = vst [vmem:[%s221 + $0x88] sm:$0xff] %v535
        %612 = vst [vmem:[%s221 + $0x90] sm:$0xff] %v540
        %613 = vst [vmem:[%s221 + $0x98] sm:$0xff] %v543
        %614 = vst [vmem:[%s221 + $0xa0] sm:$0xff] %v548
        %615 = vst [vmem:[%s221 + $0xa8] sm:$0xff] %v551
        %616 = vst [vmem:[%s221 + $0xb0] sm:$0xff] %v556
        %617 = vst [vmem:[%s221 + $0xb8] sm:$0xff] %v559
        %618 = vst [vmem:[%s221 + $0xc0] sm:$0xff] %v564
        %619 = vst [vmem:[%s221 + $0xc8] sm:$0xff] %v567
        %620 = vst [vmem:[%s221 + $0xd0] sm:$0xff] %v572
        %621 = vst [vmem:[%s221 + $0xd8] sm:$0xff] %v575
        %622 = vst [vmem:[%s221 + $0xe0] sm:$0xff] %v580
        %623 = vst [vmem:[%s221 + $0xe8] sm:$0xff] %v583
        %624 = vst [vmem:[%s221 + $0xf0] sm:$0xff] %v588
        %625 = vst [vmem:[%s221 + $0xf8] sm:$0xff] %v591
        %s626 = sand.u32 %s128, 1
        %s627 = scalar_lea.sflag [#allocation3], %s626
        %s628 = sand.u32 %s128, 1
        %s629 = smul.addr %s628, 256
        %s630 = scalar_lea.vmem [#allocation2], %s629
        // Predicated region
        $region33: #{tpu_custom_call.1} parent=31 // pred_check
          %p631 = pneg %p138
        $region34: #{tpu_custom_call.1} parent=31 // pred_check_branch
          %633 = sbr.rel (%p631) target = $region36
        $region35: #{tpu_custom_call.1} parent=31 // pred_region
          %s634 = smul.u32 32, %s23
          %s636 = ssub.s32 4096, 4096
          %637 = vsyncadd %s627, %s636
          %s638 = sadd.s32 %s24, %s634
          %s639 = smul.addr %s22, 32
          %s640 = sadd.s32 %s638, %s639
          %s641 = smul.addr %s640, 128
          %s642 = scalar_lea.hbm %s3, %s641
          %s643 = sshll.u32 %s630, 4
          %s644 = int_to_ptr.vmem [resolvable:$true] %s643
          %649 = dma.vmem_to_hbm [thread:$0]  %s644, 4096, %s642, %s627, 128, 128, 8
        $region36: #{tpu_custom_call.1} parent=31 // pred_fallthru
          _
      $region32: #{tpu_custom_call.1} parent=5 // pred_fallthru
        _
      %p650 = scmp.le.s32.totalorder 2, %s12
      // Predicated region
      $region37: #{tpu_custom_call.1} parent=5 // pred_check
        %p651 = pneg %p650
      $region38: #{tpu_custom_call.1} parent=5 // pred_check_branch
        %653 = sbr.rel (%p651) target = $region40
      $region39: #{tpu_custom_call.1} parent=5 // pred_region
        %s654 = ssub.s32 %s12, 2
        // Predicated region
        $region41: #{tpu_custom_call.1} parent=39 // pred_check
          %p655 = pneg %p144
        $region42: #{tpu_custom_call.1} parent=39 // pred_check_branch
          %657 = sbr.rel (%p655) target = $region44
        $region43: #{tpu_custom_call.1} parent=39 // pred_region
          %s658 = sand.u32 %s129, 1
          %s659 = scalar_lea.sflag [#allocation3], %s658
          %s660 = sand.u32 %s129, 1
          %s661 = smul.addr %s660, 256
          %s662 = scalar_lea.vmem [#allocation2], %s661
          %663 = dma.done %s659, 4096
        $region44: #{tpu_custom_call.1} parent=39 // pred_fallthru
          _
      $region40: #{tpu_custom_call.1} parent=5 // pred_fallthru
        _
    $region6: #{tpu_custom_call.1} parent=1 // loop_footer
      %s16 = sadd.s32 1, %s12
    $region7: #{tpu_custom_call.1} parent=1 // loop_footer_branch
      %11 = sbr.rel target = $region3
    $region8: #{tpu_custom_call.1} parent=1 // loop_exit
      _
    %664 = vsyncpa [#allocation3], 1
    %s665 = scalar_lea.sflag [#allocation3], 1
    %666 = vsyncpa %s665, 1

</llo_original>
